<compile_context>
chip_gen: v6e
topology: v6e:2x2x1
jax: 0.10.0
libtpu: 0.0.40
codegen_flags: <defaults>
</compile_context>

<pallas_src>
import jax
import jax.numpy as jnp
from jax.experimental import pallas as pl
from jax.experimental.pallas import tpu as pltpu


def encoder_kernel(x_ref, wconv_ref, bconv_ref, wlin_ref, blin_ref,
                   emb_ref, idx_ref):
    # x_ref:     (bB, R, D)   float32
    # wconv_ref: (CL*D, K)    bfloat16   (Conv2d weight, im2col layout)
    # bconv_ref: (1, K)       float32
    # wlin_ref:  (K, L)       bfloat16   (Linear weight, transposed)
    # blin_ref:  (1, L)       float32
    # emb_ref:   (bB, L)      float32    output
    # idx_ref:   (bB, K)      int32      maxpool argmax output
    bB, R, D = x_ref.shape
    CLD, K = wconv_ref.shape
    CL = CLD // D
    T = R - CL + 1  # conv output height == pooled window length

    x = x_ref[...]                                             # (bB, R, D) fp32

    # --- im2col: CL shifted slices, concatenated along the lane axis. -------
    patches = jnp.concatenate(
        [x[:, c:c + T, :] for c in range(CL)], axis=-1)        # (bB, T, CL*D)
    lhs = patches.astype(wconv_ref.dtype)                      # bf16 MXU operand

    # --- Conv2d: single fused contraction (bB*T rows x CL*D depth x K cols).
    # 'btc,ck->btk' keeps the weight un-broadcast; Mosaic fuses (b, t) into
    # the matmul row dimension -> one MXU pass per grid step.
    conv = jnp.einsum('btc,ck->btk', lhs, wconv_ref[...],
                      preferred_element_type=jnp.float32)      # (bB, T, K) fp32
    relu0 = jnp.maximum(conv + bconv_ref[...], 0.0)            # bias bcast (1, K)

    # --- MaxPool over T with indices: one batched max, one iota, one min. ---
    mx = jnp.max(relu0, axis=1)                                # (bB, K)
    iota = jax.lax.broadcasted_iota(jnp.int32, (bB, T, K), 1)
    # First index of the max (matches argmax; PyTorch tie-break is impl-defined).
    idx = jnp.min(jnp.where(relu0 == mx[:, None, :], iota, T), axis=1)  # (bB, K)

    # --- Linear + ReLU: one (bB, K) @ (K, L) matmul, full-block stores. ------
    fc = jnp.dot(mx.astype(wlin_ref.dtype), wlin_ref[...],
                 preferred_element_type=jnp.float32) + blin_ref[...]
    emb_ref[...] = jnp.maximum(fc, 0.0)
    idx_ref[...] = idx


def prepare_encoder_params(conv_w, conv_b, lin_w, lin_b,
                           matmul_dtype=jnp.bfloat16):
    """One-time parameter repack — call at parameter-load time, NOT per forward.

    conv_w: (K, 1, CL, D) -> (CL*D, K) im2col layout (row index = c*D + d)
    lin_w:  (L, K)        -> (K, L)
    Weights are cast to `matmul_dtype` (bf16 MXU operands); biases stay fp32.
    """
    K, _, CL, D = conv_w.shape
    L = lin_w.shape[0]
    wconv = jnp.transpose(conv_w[:, 0, :, :], (1, 2, 0))       # (CL, D, K)
    wconv = wconv.reshape(CL * D, K).astype(matmul_dtype)      # (CL*D, K)
    bconv = conv_b.reshape(1, K).astype(jnp.float32)
    wlin = jnp.transpose(lin_w, (1, 0)).astype(matmul_dtype)   # (K, L)
    blin = lin_b.reshape(1, L).astype(jnp.float32)
    return wconv, bconv, wlin, blin


def encoder_forward(x, wconv, bconv, wlin, blin, *, block_b=None):
    """x: (B, 1, R, D) NCHW fp32; weights from prepare_encoder_params().
    Returns (emb (B, L) fp32, indices (B, K, 1, 1) int32)."""
    B, _, R, D = x.shape
    CLD, K = wconv.shape
    L = wlin.shape[1]

    # Block the batch axis: grid over B blocks, "parallel" so v7x's two
    # TensorCores split the batch and the x DMA pipelines block-by-block.
    if block_b is None:
        block_b = B if B <= 8 else 8
    if B % block_b != 0:
        block_b = B   # TODO(synk): pad B to a multiple of block_b for ragged batches.
    grid = (B // block_b,)

    x3 = x[:, 0, :, :].astype(jnp.float32)                     # (B, R, D)

    emb, idx = pl.pallas_call(
        encoder_kernel,
        grid=grid,
        in_specs=[
            pl.BlockSpec((block_b, R, D), lambda i: (i, 0, 0)),   # x block
            pl.BlockSpec((CLD, K), lambda i: (0, 0)),             # conv weight
            pl.BlockSpec((1, K), lambda i: (0, 0)),               # conv bias
            pl.BlockSpec((K, L), lambda i: (0, 0)),               # linear weight
            pl.BlockSpec((1, L), lambda i: (0, 0)),               # linear bias
        ],
        out_specs=[
            pl.BlockSpec((block_b, L), lambda i: (i, 0)),
            pl.BlockSpec((block_b, K), lambda i: (i, 0)),
        ],
        out_shape=[
            jax.ShapeDtypeStruct((B, L), jnp.float32),
            jax.ShapeDtypeStruct((B, K), jnp.int32),
        ],
        # VMEM budget per block ≈ 2*block_b*R*D*4 (double-buffered x) +
        # CL*D*K*2 + K*L*2 + patches + outputs.  For production DeepCoNN
        # shapes pick block_b so this stays under the scoped limit (16 MiB
        # v5e, 32 MiB v6e/v7x) or raise vmem_limit_bytes here.
        compiler_params=pltpu.CompilerParams(
            dimension_semantics=("parallel",),
        ),
    )(x3, wconv, bconv, wlin, blin)

    # PyTorch: emb stays (B, L) for B > 1 (Flatten.squeeze); maxpool indices
    # keep their (B, K, 1, 1) shape.
    # TODO(synk): PyTorch returns int64 indices; TPU kernel emits int32.
    # TODO(synk): the PyTorch Flatten.squeeze() would also drop the batch dim
    #             when B == 1; we always return (B, L).
    return emb, idx.reshape(B, K, 1, 1)


if __name__ == "__main__":
    # Small, module-consistent shapes.
    B = 2
    conv_kernel_num = 8      # K
    conv_length = 3          # CL
    word_vec_dim = 16        # D
    review_length = 8        # R
    latent_factor_num = 32   # L

    key = jax.random.PRNGKey(0)
    kx, kw, kb, klw, klb = jax.random.split(key, 5)
    x = jax.random.normal(kx, (B, 1, review_length, word_vec_dim), jnp.float32)
    conv_w = 0.1 * jax.random.normal(
        kw, (conv_kernel_num, 1, conv_length, word_vec_dim), jnp.float32)
    conv_b = 0.1 * jax.random.normal(kb, (conv_kernel_num,), jnp.float32)
    lin_w = 0.1 * jax.random.normal(
        klw, (latent_factor_num, conv_kernel_num), jnp.float32)
    lin_b = 0.1 * jax.random.normal(klb, (latent_factor_num,), jnp.float32)

    # One-time weight repack (outside the per-call path).
    params = prepare_encoder_params(conv_w, conv_b, lin_w, lin_b)
    fwd = jax.jit(encoder_forward)
    emb, indices = fwd(x, *params)
    jax.block_until_ready((emb, indices))

    # Plain-JAX reference using the same bf16-rounded matmul operands and fp32
    # accumulation, mirroring the kernel's numerics.
    rb = lambda a: a.astype(jnp.bfloat16).astype(jnp.float32)
    hi = jax.lax.Precision.HIGHEST
    T = review_length - conv_length + 1
    x_r = rb(x[:, 0])                                   # (B, R, D)
    wc_r = rb(conv_w[:, 0])                             # (K, CL, D)
    patches_ref = jnp.stack(
        [x_r[:, c:c + T, :] for c in range(conv_length)], axis=2)  # (B, T, CL, D)
    conv_ref = jnp.einsum('btcd,kcd->btk', patches_ref, wc_r,
                          precision=hi,
                          preferred_element_type=jnp.float32) + conv_b
    relu_ref = jnp.maximum(conv_ref, 0.0)
    mx_ref = relu_ref.max(axis=1)
    idx_ref = relu_ref.argmax(axis=1).astype(jnp.int32)
    emb_ref = jnp.maximum(
        jnp.dot(rb(mx_ref), rb(lin_w).T, precision=hi,
                preferred_element_type=jnp.float32) + lin_b, 0.0)

    assert emb.shape == (B, latent_factor_num)
    assert indices.shape == (B, conv_kernel_num, 1, 1)
    assert jnp.allclose(emb, emb_ref, atol=1e-2), "emb mismatch"
    assert jnp.array_equal(indices.reshape(B, conv_kernel_num), idx_ref), "idx mismatch"
    print("KERNEL_OK")
</pallas_src>

<mosaic_0001>
module attributes {stable_mosaic.version = 11 : i64} {
  func.func @encoder_kernel(%arg0: i32, %arg1: memref<2x8x16xf32, #tpu.memory_space<vmem>>, %arg2: memref<48x8xbf16, #tpu.memory_space<vmem>>, %arg3: memref<1x8xf32, #tpu.memory_space<vmem>>, %arg4: memref<8x32xbf16, #tpu.memory_space<vmem>>, %arg5: memref<1x32xf32, #tpu.memory_space<vmem>>, %arg6: memref<2x32xf32, #tpu.memory_space<vmem>>, %arg7: memref<2x8xi32, #tpu.memory_space<vmem>>) attributes {dimension_semantics = [#tpu.dimension_semantics<parallel>], iteration_bounds = array<i64: 1>, scalar_prefetch = 0 : i64, scratch_operands = 0 : i64, tpu.core_type = #tpu.core_type<tc>, window_params = [{transform_indices = @transform_0, window_bounds = array<i64: 2, 8, 16>}, {pipeline_mode = #tpu.pipeline_mode<synchronous>, transform_indices = @transform_1, window_bounds = array<i64: 48, 8>}, {pipeline_mode = #tpu.pipeline_mode<synchronous>, transform_indices = @transform_2, window_bounds = array<i64: 1, 8>}, {pipeline_mode = #tpu.pipeline_mode<synchronous>, transform_indices = @transform_3, window_bounds = array<i64: 8, 32>}, {pipeline_mode = #tpu.pipeline_mode<synchronous>, transform_indices = @transform_4, window_bounds = array<i64: 1, 32>}, {transform_indices = @transform_5, window_bounds = array<i64: 2, 32>}, {transform_indices = @transform_6, window_bounds = array<i64: 2, 8>}]} {
    %c0 = arith.constant 0 : index
    %c0_0 = arith.constant 0 : index
    %c0_1 = arith.constant 0 : index
    %0 = vector.load %arg1[%c0, %c0_0, %c0_1] : memref<2x8x16xf32, #tpu.memory_space<vmem>>, vector<2x8x16xf32>
    %1 = vector.extract_strided_slice %0 {offsets = [0, 0, 0], sizes = [2, 6, 16], strides = [1, 1, 1]} : vector<2x8x16xf32> to vector<2x6x16xf32>
    %2 = vector.extract_strided_slice %0 {offsets = [0, 1, 0], sizes = [2, 6, 16], strides = [1, 1, 1]} : vector<2x8x16xf32> to vector<2x6x16xf32>
    %3 = vector.extract_strided_slice %0 {offsets = [0, 2, 0], sizes = [2, 6, 16], strides = [1, 1, 1]} : vector<2x8x16xf32> to vector<2x6x16xf32>
    %4 = tpu.concatenate %1, %2, %3 in 2 : vector<2x6x16xf32>, vector<2x6x16xf32>, vector<2x6x16xf32> -> vector<2x6x48xf32>
    %5 = arith.truncf %4 : vector<2x6x48xf32> to vector<2x6x48xbf16>
    %c0_2 = arith.constant 0 : index
    %c0_3 = arith.constant 0 : index
    %6 = vector.load %arg2[%c0_2, %c0_3] : memref<48x8xbf16, #tpu.memory_space<vmem>>, vector<48x8xbf16>
    "tpu.trace_start"() <{level = 10 : i32, message = "btc,ck->btk"}> : () -> ()
    %cst = arith.constant dense<0.000000e+00> : vector<2x6x8xf32>
    %7 = tpu.matmul %5, %6, %cst {dimension_numbers = #tpu.dot_dimension_numbers<[2], [0], [0, 1], [1], [0, 0, 0, 1, 1, 1], [], []>} : vector<2x6x48xbf16>, vector<48x8xbf16>, vector<2x6x8xf32> -> vector<2x6x8xf32>
    "tpu.trace_stop"() : () -> ()
    %c0_4 = arith.constant 0 : index
    %c0_5 = arith.constant 0 : index
    %8 = vector.load %arg3[%c0_4, %c0_5] : memref<1x8xf32, #tpu.memory_space<vmem>>, vector<1x8xf32>
    %9 = vector.shape_cast %8 : vector<1x8xf32> to vector<1x1x8xf32>
    %10 = vector.broadcast %9 : vector<1x1x8xf32> to vector<2x6x8xf32>
    %11 = arith.addf %7, %10 : vector<2x6x8xf32>
    %cst_6 = arith.constant 0.000000e+00 : f32
    %12 = vector.broadcast %cst_6 : f32 to vector<2x6x8xf32>
    %13 = arith.maximumf %11, %12 : vector<2x6x8xf32>
    %cst_7 = arith.constant dense<0xFF800000> : vector<2x8xf32>
    %14 = vector.multi_reduction <maximumf>, %13, %cst_7 [1] : vector<2x6x8xf32> to vector<2x8xf32>
    %15 = tpu.iota {dimensions = array<i32: 1>} : vector<2x6x8xi32>
    %16 = vector.shape_cast %14 : vector<2x8xf32> to vector<2x1x8xf32>
    %17 = vector.broadcast %16 : vector<2x1x8xf32> to vector<2x6x8xf32>
    %18 = arith.cmpf oeq, %13, %17 : vector<2x6x8xf32>
    %c6_i32 = arith.constant 6 : i32
    %19 = vector.broadcast %c6_i32 : i32 to vector<2x6x8xi32>
    %20 = arith.select %18, %15, %19 : vector<2x6x8xi1>, vector<2x6x8xi32>
    %cst_8 = arith.constant dense<2147483647> : vector<2x8xi32>
    %21 = vector.multi_reduction <minsi>, %20, %cst_8 [1] : vector<2x6x8xi32> to vector<2x8xi32>
    %22 = arith.truncf %14 : vector<2x8xf32> to vector<2x8xbf16>
    %c0_9 = arith.constant 0 : index
    %c0_10 = arith.constant 0 : index
    %23 = vector.load %arg4[%c0_9, %c0_10] : memref<8x32xbf16, #tpu.memory_space<vmem>>, vector<8x32xbf16>
    %cst_11 = arith.constant dense<0.000000e+00> : vector<2x32xf32>
    %24 = tpu.matmul %22, %23, %cst_11 {dimension_numbers = #tpu.dot_dimension_numbers<[1], [0], [0], [1], [0, 0, 1, 1], [], []>} : vector<2x8xbf16>, vector<8x32xbf16>, vector<2x32xf32> -> vector<2x32xf32>
    %c0_12 = arith.constant 0 : index
    %c0_13 = arith.constant 0 : index
    %25 = vector.load %arg5[%c0_12, %c0_13] : memref<1x32xf32, #tpu.memory_space<vmem>>, vector<1x32xf32>
    %26 = vector.broadcast %25 : vector<1x32xf32> to vector<2x32xf32>
    %27 = arith.addf %24, %26 : vector<2x32xf32>
    %cst_14 = arith.constant 0.000000e+00 : f32
    %28 = vector.broadcast %cst_14 : f32 to vector<2x32xf32>
    %29 = arith.maximumf %27, %28 : vector<2x32xf32>
    %c0_15 = arith.constant 0 : index
    %c0_16 = arith.constant 0 : index
    %30 = vector.load %arg6[%c0_15, %c0_16] : memref<2x32xf32, #tpu.memory_space<vmem>>, vector<2x32xf32>
    tpu.vector_store %arg6[%c0_15, %c0_16], %29 {strides = array<i32>} : memref<2x32xf32, #tpu.memory_space<vmem>>, vector<2x32xf32>,
    %c0_17 = arith.constant 0 : index
    %c0_18 = arith.constant 0 : index
    %31 = vector.load %arg7[%c0_17, %c0_18] : memref<2x8xi32, #tpu.memory_space<vmem>>, vector<2x8xi32>
    tpu.vector_store %arg7[%c0_17, %c0_18], %21 {strides = array<i32>} : memref<2x8xi32, #tpu.memory_space<vmem>>, vector<2x8xi32>,
    return
  }
  func.func @transform_0(%arg0: i32) -> (i32, i32, i32) {
    %c0_i32 = arith.constant 0 : i32
    %c0_i32_0 = arith.constant 0 : i32
    %c0_i32_1 = arith.constant 0 : i32
    return %arg0, %c0_i32, %c0_i32_0 : i32, i32, i32
  }
  func.func @transform_1(%arg0: i32) -> (i32, i32) {
    %c0_i32 = arith.constant 0 : i32
    %c0_i32_0 = arith.constant 0 : i32
    %c0_i32_1 = arith.constant 0 : i32
    return %c0_i32, %c0_i32_0 : i32, i32
  }
  func.func @transform_2(%arg0: i32) -> (i32, i32) {
    %c0_i32 = arith.constant 0 : i32
    %c0_i32_0 = arith.constant 0 : i32
    %c0_i32_1 = arith.constant 0 : i32
    return %c0_i32, %c0_i32_0 : i32, i32
  }
  func.func @transform_3(%arg0: i32) -> (i32, i32) {
    %c0_i32 = arith.constant 0 : i32
    %c0_i32_0 = arith.constant 0 : i32
    %c0_i32_1 = arith.constant 0 : i32
    return %c0_i32, %c0_i32_0 : i32, i32
  }
  func.func @transform_4(%arg0: i32) -> (i32, i32) {
    %c0_i32 = arith.constant 0 : i32
    %c0_i32_0 = arith.constant 0 : i32
    %c0_i32_1 = arith.constant 0 : i32
    return %c0_i32, %c0_i32_0 : i32, i32
  }
  func.func @transform_5(%arg0: i32) -> (i32, i32) {
    %c0_i32 = arith.constant 0 : i32
    %c0_i32_0 = arith.constant 0 : i32
    return %arg0, %c0_i32 : i32, i32
  }
  func.func @transform_6(%arg0: i32) -> (i32, i32) {
    %c0_i32 = arith.constant 0 : i32
    %c0_i32_0 = arith.constant 0 : i32
    return %arg0, %c0_i32 : i32, i32
  }
}

</mosaic_0001>

<llo_original>
// kernel: encoder_forward.1
$region0: #{encoder_forward.1}
  #allocation0 [shape = 'u32[]', space=smem, size = 0x4, offset = 0x4, fixed_abs, tag = 'smem constant byte address 0x4 - core index']
  #allocation1 [shape = 'u32[144,128]{1,0:T(1,128)}', space=vmem, size = 0x12000, scoped, tag = 'internal scratch']
  %s0 = inlined_call_operand.vmem [shape: f32[2,8,16], index: 0, kind: input, shape index: {}]
  %s1 = inlined_call_operand.vmem [shape: bf16[48,8], index: 1, kind: input, shape index: {}]
  %s2 = inlined_call_operand.vmem [shape: f32[1,8], index: 2, kind: input, shape index: {}]
  %s3 = inlined_call_operand.vmem [shape: bf16[8,32], index: 3, kind: input, shape index: {}]
  %s4 = inlined_call_operand.vmem [shape: f32[1,32], index: 4, kind: input, shape index: {}]
  %s5 = inlined_call_operand.hbm [shape: f32[2,32], index: 5, kind: output, shape index: {0}]
  %s6 = inlined_call_operand.hbm [shape: s32[2,8], index: 6, kind: output, shape index: {1}]
  %7 = xla_tuple %s5, %s6
  %s8 = sld [smem:[#allocation0]]
  $region38: #{encoder_forward.1} parent=0
    _
  %s10 = ssub.s32 1, %s8
  %s11 = scalar_select 0, %s10, %s8
  $region1: #{encoder_forward.1} parent=0
    #allocation2 [shape = 'u8[1024]{0}', space=vmem, size = 0x400, scoped, tag = 'output window, operand 0, single buffered']
    #allocation3 [shape = 's32[1]{0}', space=sflag, size = 0x4, scoped, tag = 'scoped memory for encoder_forward.1']
    #allocation4 [shape = 'u8[1024]{0}', space=vmem, size = 0x400, scoped, tag = 'output window, operand 1, single buffered']
    #allocation5 [shape = 's32[1]{0}', space=sflag, size = 0x4, scoped, tag = 'scoped memory for encoder_forward.1']
    %12 = vsyncpa [#allocation3], 0
    %13 = vsyncpa [#allocation5], 0
    // Predicated region
    $region2: #{encoder_forward.1} parent=1 // pred_check
      _
    $region3: #{encoder_forward.1} parent=1 // pred_check_branch
      %15 = sbr.rel (0) target = $region5
    $region4: #{encoder_forward.1} parent=1 // pred_region
      _
    $region5: #{encoder_forward.1} parent=1 // pred_fallthru
      _
    // Predicated region
    $region6: #{encoder_forward.1} parent=1 // pred_check
      _
    $region7: #{encoder_forward.1} parent=1 // pred_check_branch
      %17 = sbr.rel (0) target = $region9
    $region8: #{encoder_forward.1} parent=1 // pred_region
      _
    $region9: #{encoder_forward.1} parent=1 // pred_fallthru
      _
    // Predicated region
    $region10: #{encoder_forward.1} parent=1 // pred_check
      _
    $region11: #{encoder_forward.1} parent=1 // pred_check_branch
      %19 = sbr.rel (0) target = $region13
    $region12: #{encoder_forward.1} parent=1 // pred_region
      _
    $region13: #{encoder_forward.1} parent=1 // pred_fallthru
      _
    // Predicated region
    $region14: #{encoder_forward.1} parent=1 // pred_check
      _
    $region15: #{encoder_forward.1} parent=1 // pred_check_branch
      %21 = sbr.rel (0) target = $region17
    $region16: #{encoder_forward.1} parent=1 // pred_region
      _
    $region17: #{encoder_forward.1} parent=1 // pred_fallthru
      _
    // Predicated region
    $region18: #{encoder_forward.1} parent=1 // pred_check
      _
    $region19: #{encoder_forward.1} parent=1 // pred_check_branch
      %23 = sbr.rel (0) target = $region21
    $region20: #{encoder_forward.1} parent=1 // pred_region
      _
    $region21: #{encoder_forward.1} parent=1 // pred_fallthru
      _
    %v25 = vld [vmem:[%s0] sm:$0xff]
    %v26 = vld [vmem:[%s0 + $0x8] sm:$0xff]
    %v29 = vrot.slane %v25, 1
    %v30 = vrot.slane %v26, 1
    %31 = vrot.lane.b32.xlu0 %v29, 16
    %v32 = vpop.permute.xlu0 %31
    %33 = vrot.lane.b32.xlu0 %v30, 16
    %v34 = vpop.permute.xlu0 %33
    %v37 = vrot.slane %v25, 2
    %v38 = vrot.slane %v26, 2
    %39 = vrot.lane.b32.xlu0 %v37, 32
    %v40 = vpop.permute.xlu0 %39
    %41 = vrot.lane.b32.xlu0 %v38, 32
    %v42 = vpop.permute.xlu0 %41
    %vm45 = vcmask 130048
    %v46 = vsel %vm45, %v25, %v32
    %v47 = vsel %vm45, %v26, %v34
    %vm48 = vcmask 261120
    %v49 = vsel %vm48, %v46, %v40
    %v50 = vsel %vm48, %v47, %v42
    %v51 = vpack.c.bf16 %v49, %v49
    %v52 = vpack.c.bf16 %v50, %v50
    %v53 = vld [vmem:[%s1] sm:$0xf]
    %v54 = vld [vmem:[%s1 + $0x4] sm:$0xf]
    %v55 = vld [vmem:[%s1 + $0x8] sm:$0xf]
    %v56 = vld [vmem:[%s1 + $0xc] sm:$0xf]
    %v57 = vld [vmem:[%s1 + $0x10] sm:$0xf]
    %v58 = vld [vmem:[%s1 + $0x14] sm:$0xf]
    %v59 = vld [vmem:[%s2] sm:$0x1]
    %v61 = vlaneseq
    %v62 = vshrl.u32 %v61, 7
    %v63 = vsub.s32 0, %v62
    %v64 = vrot.slane %v59, %v63
    %v68 = vunpack.c.l.s4 1966171168
    %v69 = vunpack.c.0.s8 %v68
    %v70 = vlaneseq
    %v71 = vshrl.u32 %v70, 7
    %v72 = vsub.s32 %v69, %v71
    %v73 = vrot.slane %v51, %v72
    %v74 = vcombine.high %v73, %v73
    %v76 = vunpack.c.l.s4 1966171168
    %v77 = vunpack.c.0.s8 %v76
    %v78 = vlaneseq
    %v79 = vshrl.u32 %v78, 7
    %v80 = vsub.s32 %v77, %v79
    %v81 = vrot.slane %v73, %v80
    %v83 = vunpack.c.l.s4 1966171168
    %v84 = vunpack.c.0.s8 %v83
    %v85 = vlaneseq
    %v86 = vshrl.u32 %v85, 7
    %v87 = vsub.s32 %v84, %v86
    %v88 = vrot.slane %v74, %v87
    %v89 = vcombine.high %v81, %v81
    %v91 = vunpack.c.l.s4 1966171168
    %v92 = vunpack.c.0.s8 %v91
    %v93 = vlaneseq
    %v94 = vshrl.u32 %v93, 7
    %v95 = vsub.s32 %v92, %v94
    %v96 = vrot.slane %v52, %v95
    %v97 = vcombine.high %v96, %v96
    %v99 = vunpack.c.l.s4 1966171168
    %v100 = vunpack.c.0.s8 %v99
    %v101 = vlaneseq
    %v102 = vshrl.u32 %v101, 7
    %v103 = vsub.s32 %v100, %v102
    %v104 = vrot.slane %v96, %v103
    %v106 = vunpack.c.l.s4 1966171168
    %v107 = vunpack.c.0.s8 %v106
    %v108 = vlaneseq
    %v109 = vshrl.u32 %v108, 7
    %v110 = vsub.s32 %v107, %v109
    %v111 = vrot.slane %v97, %v110
    %v112 = vcombine.high %v104, %v104
    %v113 = vcombine.high %v64, %v64
    %v115 = vunpack.c.l.s4 1983009808
    %v116 = vunpack.c.0.s8 %v115
    %v117 = vlaneseq
    %v118 = vshrl.u32 %v117, 7
    %v119 = vsub.s32 %v116, %v118
    %v120 = vrot.slane %v64, %v119
    %v122 = vunpack.c.l.s4 1983009808
    %v123 = vunpack.c.0.s8 %v122
    %v124 = vlaneseq
    %v125 = vshrl.u32 %v124, 7
    %v126 = vsub.s32 %v123, %v125
    %v127 = vrot.slane %v113, %v126
    %v128 = vcombine.high %v120, %v120
    %v129 = vcombine.low %v81, %v88
    %v130 = vcombine.low %v89, %v104
    %v131 = vcombine.low %v111, %v112
    %v133 = vunpack.c.l.s4 1966171168
    %v134 = vunpack.c.0.s8 %v133
    %v135 = vlaneseq
    %v136 = vshrl.u32 %v135, 7
    %v137 = vsub.s32 %v134, %v136
    %v138 = vrot.slane %v129, %v137
    %v140 = vunpack.c.l.s4 1966171168
    %v141 = vunpack.c.0.s8 %v140
    %v142 = vlaneseq
    %v143 = vshrl.u32 %v142, 7
    %v144 = vsub.s32 %v141, %v143
    %v145 = vrot.slane %v130, %v144
    %v147 = vunpack.c.l.s4 1966171168
    %v148 = vunpack.c.0.s8 %v147
    %v149 = vlaneseq
    %v150 = vshrl.u32 %v149, 7
    %v151 = vsub.s32 %v148, %v150
    %v152 = vrot.slane %v131, %v151
    %v153 = vcombine.low %v138, %v145
    %v155 = vunpack.c.l.s4 1966171168
    %v156 = vunpack.c.0.s8 %v155
    %v157 = vlaneseq
    %v158 = vshrl.u32 %v157, 7
    %v159 = vsub.s32 %v156, %v158
    %v160 = vrot.slane %v153, %v159
    %v162 = vunpack.c.l.s4 1966171168
    %v163 = vunpack.c.0.s8 %v162
    %v164 = vlaneseq
    %v165 = vshrl.u32 %v164, 7
    %v166 = vsub.s32 %v163, %v165
    %v167 = vrot.slane %v152, %v166
    %v168 = vcombine.low %v160, %v167
    %v175 = vunpack.c.l.b16 %v53
    %v176 = vunpack.c.l.b16 %v54
    %v177 = vunpack.c.l.b16 %v55
    %v178 = vunpack.c.l.b16 %v56
    %v179 = vunpack.c.l.b16 %v57
    %v180 = vunpack.c.l.b16 %v58
    %v181 = vpack.c.b16 %v176, %v175
    %v182 = vpack.c.b16 %v178, %v177
    %v183 = vpack.c.b16 %v180, %v179
    %v187 = vcombine.low %v120, %v128
    %v188 = vcombine.low %v127, %v120
    %v190 = vunpack.c.l.s4 1983009808
    %v191 = vunpack.c.0.s8 %v190
    %v192 = vlaneseq
    %v193 = vshrl.u32 %v192, 7
    %v194 = vsub.s32 %v191, %v193
    %v195 = vrot.slane %v187, %v194
    %v197 = vunpack.c.l.s4 1983009808
    %v198 = vunpack.c.0.s8 %v197
    %v199 = vlaneseq
    %v200 = vshrl.u32 %v199, 7
    %v201 = vsub.s32 %v198, %v200
    %v202 = vrot.slane %v188, %v201
    %v203 = vcombine.low %v195, %v202
    %v204 = vcombine.low %v128, %v127
    %v206 = vunpack.c.l.s4 1983009808
    %v207 = vunpack.c.0.s8 %v206
    %v208 = vlaneseq
    %v209 = vshrl.u32 %v208, 7
    %v210 = vsub.s32 %v207, %v209
    %v211 = vrot.slane %v204, %v210
    %vm214 = vcmask 392192
    %v216 = vsel %vm214, %v168, 0
    %218 = vmatprep.subr.bf16.mxu0 0
    %219 = vmatpush1.bf16.msra.mxu0 0
    %220 = vmatprep.subr.bf16.mxu0 0
    %221 = vmatpush1.bf16.msra.mxu0 0
    %222 = vmatprep.subr.bf16.mxu0 0
    %223 = vmatpush1.bf16.msra.mxu0 0
    %224 = vmatprep.subr.bf16.mxu0 0
    %225 = vmatpush1.bf16.msra.mxu0 0
    %226 = vmatprep.subr.bf16.mxu0 0
    %227 = vmatpush1.bf16.msra.mxu0 0
    %228 = vmatprep.subr.bf16.mxu0 0
    %229 = vmatpush1.bf16.msra.mxu0 %v183
    %230 = vmatprep.subr.bf16.mxu0 0
    %231 = vmatpush1.bf16.msra.mxu0 %v182
    %232 = vmatprep.subr.bf16.mxu0 0
    %233 = vmatpush1.bf16.msra.mxu0 %v181
    %234 = vmatprep.subr.bf16.mxu0 0
    %235 = vmatpush2.bf16.msra.mxu0 0
    %236 = vmatprep.subr.bf16.mxu0 0
    %237 = vmatpush2.bf16.msra.mxu0 0
    %238 = vmatprep.subr.bf16.mxu0 0
    %239 = vmatpush2.bf16.msra.mxu0 0
    %240 = vmatprep.subr.bf16.mxu0 0
    %241 = vmatpush2.bf16.msra.mxu0 0
    %242 = vmatprep.subr.bf16.mxu0 0
    %243 = vmatpush2.bf16.msra.mxu0 0
    %244 = vmatprep.subr.bf16.mxu0 0
    %245 = vmatpush2.bf16.msra.mxu0 0
    %246 = vmatprep.subr.bf16.mxu0 0
    %247 = vmatpush2.bf16.msra.mxu0 0
    %248 = vmatprep.subr.bf16.mxu0 0
    %249 = vmatpush2.bf16.msra.mxu0 0
    %250 = vmatprep.mubr.bf16.mxu0 0
    %251 = vmatmul.mubr.bf16.gmra.mxu0 %v216
    %v252 = vpop.f32.mrf.mxu0
    %v253 = vadd.f32 %v203, %v252
    %v254 = vpop.f32.mrf.mxu0
    %v255 = vpop.f32.mrf.mxu0
    %v256 = vadd.f32 %v211, %v255
    %v257 = vpop.f32.mrf.mxu0
    %258 = vdwg.mxu0
    %v261 = vcombine.high %v253, %v253
    %v263 = vunpack.c.l.s4 1983009808
    %v264 = vunpack.c.0.s8 %v263
    %v265 = vlaneseq
    %v266 = vshrl.u32 %v265, 7
    %v267 = vsub.s32 %v264, %v266
    %v268 = vrot.slane %v253, %v267
    %v270 = vunpack.c.l.s4 1983009808
    %v271 = vunpack.c.0.s8 %v270
    %v272 = vlaneseq
    %v273 = vshrl.u32 %v272, 7
    %v274 = vsub.s32 %v271, %v273
    %v275 = vrot.slane %v261, %v274
    %v276 = vcombine.high %v268, %v268
    %v277 = vcombine.high %v275, %v275
    %v279 = vunpack.c.l.s4 1983009808
    %v280 = vunpack.c.0.s8 %v279
    %v281 = vlaneseq
    %v282 = vshrl.u32 %v281, 7
    %v283 = vsub.s32 %v280, %v282
    %v284 = vrot.slane %v256, %v283
    %v285 = vcombine.high %v284, %v284
    %v292 = vmax.f32 %v268, 0.0
    %v293 = vmax.f32 %v276, 0.0
    %v294 = vmax.f32 %v275, 0.0
    %v295 = vmax.f32 %v277, 0.0
    %v296 = vmax.f32 %v284, 0.0
    %v297 = vmax.f32 %v285, 0.0
    %v304 = vcombine.low %v292, %v293
    %v306 = vunpack.c.l.s4 1983009808
    %v307 = vunpack.c.0.s8 %v306
    %v308 = vlaneseq
    %v309 = vshrl.u32 %v308, 7
    %v310 = vsub.s32 %v307, %v309
    %v311 = vrot.slane %v304, %v310
    %v313 = vunpack.c.l.s4 1983009808
    %v314 = vunpack.c.0.s8 %v313
    %v315 = vlaneseq
    %v316 = vshrl.u32 %v315, 7
    %v317 = vsub.s32 %v314, %v316
    %v318 = vrot.slane %v294, %v317
    %v319 = vcombine.low %v311, %v318
    %v320 = vcombine.low %v295, %v296
    %v322 = vunpack.c.l.s4 1983009808
    %v323 = vunpack.c.0.s8 %v322
    %v324 = vlaneseq
    %v325 = vshrl.u32 %v324, 7
    %v326 = vsub.s32 %v323, %v325
    %v327 = vrot.slane %v320, %v326
    %v329 = vunpack.c.l.s4 1983009808
    %v330 = vunpack.c.0.s8 %v329
    %v331 = vlaneseq
    %v332 = vshrl.u32 %v331, 7
    %v333 = vsub.s32 %v330, %v332
    %v334 = vrot.slane %v297, %v333
    %v335 = vcombine.low %v327, %v334
    %vm338 = vcmask 62464
    %v339 = vsel %vm338, %v319, -inf
    %v340 = vrot.slane %v339, 4
    %v341 = vmax.f32 %v339, %v340
    %v342 = vrot.slane %v341, 2
    %v343 = vmax.f32 %v341, %v342
    %v344 = vrot.slane %v343, 1
    %v345 = vmax.f32 %v343, %v344
    %v346 = vsel %vm338, %v335, -inf
    %v347 = vrot.slane %v346, 4
    %v348 = vmax.f32 %v346, %v347
    %v349 = vrot.slane %v348, 2
    %v350 = vmax.f32 %v348, %v349
    %v351 = vrot.slane %v350, 1
    %v352 = vmax.f32 %v350, %v351
    %v353 = vlaneseq
    %v354 = vshrl.u32 %v353, 7
    %v357 = vcombine.high %v345, %v345
    %v359 = vunpack.c.l.s4 1983009808
    %v360 = vunpack.c.0.s8 %v359
    %v361 = vlaneseq
    %v362 = vshrl.u32 %v361, 7
    %v363 = vsub.s32 %v360, %v362
    %v364 = vrot.slane %v345, %v363
    %v366 = vunpack.c.l.s4 1983009808
    %v367 = vunpack.c.0.s8 %v366
    %v368 = vlaneseq
    %v369 = vshrl.u32 %v368, 7
    %v370 = vsub.s32 %v367, %v369
    %v371 = vrot.slane %v357, %v370
    %v372 = vcombine.high %v364, %v364
    %v373 = vcombine.high %v352, %v352
    %v375 = vunpack.c.l.s4 1983009808
    %v376 = vunpack.c.0.s8 %v375
    %v377 = vlaneseq
    %v378 = vshrl.u32 %v377, 7
    %v379 = vsub.s32 %v376, %v378
    %v380 = vrot.slane %v352, %v379
    %v382 = vunpack.c.l.s4 1983009808
    %v383 = vunpack.c.0.s8 %v382
    %v384 = vlaneseq
    %v385 = vshrl.u32 %v384, 7
    %v386 = vsub.s32 %v383, %v385
    %v387 = vrot.slane %v373, %v386
    %v388 = vcombine.high %v380, %v380
    %vm395 = vcmp.eq.f32.partialorder %v292, %v364
    %vm396 = vcmp.eq.f32.partialorder %v293, %v372
    %vm397 = vcmp.eq.f32.partialorder %v294, %v371
    %vm398 = vcmp.eq.f32.partialorder %v295, %v380
    %vm399 = vcmp.eq.f32.partialorder %v296, %v388
    %vm400 = vcmp.eq.f32.partialorder %v297, %v387
    %v402 = vunpack.c.l.s4 269488144
    %v403 = vunpack.c.0.s8 %v402
    %v404 = vlaneseq
    %v405 = vshrl.u32 %v404, 7
    %v406 = vsub.s32 %v403, %v405
    %v407 = vrot.slane %v354, %v406
    %v409 = vunpack.c.l.s4 842150450
    %v410 = vunpack.c.0.s8 %v409
    %v411 = vlaneseq
    %v412 = vshrl.u32 %v411, 7
    %v413 = vsub.s32 %v410, %v412
    %v414 = vrot.slane %v354, %v413
    %v416 = vunpack.c.l.s4 1414812756
    %v417 = vunpack.c.0.s8 %v416
    %v418 = vlaneseq
    %v419 = vshrl.u32 %v418, 7
    %v420 = vsub.s32 %v417, %v419
    %v421 = vrot.slane %v354, %v420
    %v422 = vsel %vm395, %v407, 6
    %v423 = vsel %vm396, %v414, 6
    %v424 = vsel %vm397, %v421, 6
    %v425 = vsel %vm398, %v407, 6
    %v426 = vsel %vm399, %v414, 6
    %v427 = vsel %vm400, %v421, 6
    %v428 = vcombine.low %v422, %v423
    %v430 = vunpack.c.l.s4 1983009808
    %v431 = vunpack.c.0.s8 %v430
    %v432 = vlaneseq
    %v433 = vshrl.u32 %v432, 7
    %v434 = vsub.s32 %v431, %v433
    %v435 = vrot.slane %v428, %v434
    %v437 = vunpack.c.l.s4 1983009808
    %v438 = vunpack.c.0.s8 %v437
    %v439 = vlaneseq
    %v440 = vshrl.u32 %v439, 7
    %v441 = vsub.s32 %v438, %v440
    %v442 = vrot.slane %v424, %v441
    %v443 = vcombine.low %v435, %v442
    %v444 = vcombine.low %v425, %v426
    %v446 = vunpack.c.l.s4 1983009808
    %v447 = vunpack.c.0.s8 %v446
    %v448 = vlaneseq
    %v449 = vshrl.u32 %v448, 7
    %v450 = vsub.s32 %v447, %v449
    %v451 = vrot.slane %v444, %v450
    %v453 = vunpack.c.l.s4 1983009808
    %v454 = vunpack.c.0.s8 %v453
    %v455 = vlaneseq
    %v456 = vshrl.u32 %v455, 7
    %v457 = vsub.s32 %v454, %v456
    %v458 = vrot.slane %v427, %v457
    %v459 = vcombine.low %v451, %v458
    %v460 = vsel %vm338, %v443, 2147483647
    %v461 = vrot.slane %v460, 4
    %vm462 = vcmp.lt.s32.totalorder %v460, %v461
    %v463 = vsel %vm462, %v460, %v461
    %v464 = vrot.slane %v463, 2
    %vm465 = vcmp.lt.s32.totalorder %v463, %v464
    %v466 = vsel %vm465, %v463, %v464
    %v467 = vrot.slane %v466, 1
    %vm468 = vcmp.lt.s32.totalorder %v466, %v467
    %v469 = vsel %vm468, %v466, %v467
    %v470 = vsel %vm338, %v459, 2147483647
    %v471 = vrot.slane %v470, 4
    %vm472 = vcmp.lt.s32.totalorder %v470, %v471
    %v473 = vsel %vm472, %v470, %v471
    %v474 = vrot.slane %v473, 2
    %vm475 = vcmp.lt.s32.totalorder %v473, %v474
    %v476 = vsel %vm475, %v473, %v474
    %v477 = vrot.slane %v476, 1
    %vm478 = vcmp.lt.s32.totalorder %v476, %v477
    %v479 = vsel %vm478, %v476, %v477
    %v480 = vpack.c.bf16 %v345, %v345
    %v481 = vpack.c.bf16 %v352, %v352
    %v482 = vld [vmem:[%s3] sm:$0xf]
    %v483 = vld [vmem:[%s4] sm:$0x1]
    %v485 = vlaneseq
    %v486 = vshrl.u32 %v485, 7
    %v487 = vsub.s32 0, %v486
    %v488 = vrot.slane %v483, %v487
    %v492 = vunpack.c.l.b16 %v480
    %v493 = vunpack.c.l.b16 %v481
    %vm494 = vcmask 1041409
    %v495 = vsel %vm494, %v493, %v492
    %v496 = vpack.c.b16 %v495, %v495
    %vm497 = vcmask 64512
    %v499 = vsel %vm497, %v496, 0
    %vm501 = vcmask 1043456
    %v503 = vsel %vm501, %v482, 0
    %505 = vmatprep.subr.bf16.mxu0 0
    %506 = vmatpush1.bf16.msra.mxu0 0
    %507 = vmatprep.subr.bf16.mxu0 0
    %508 = vmatpush1.bf16.msra.mxu0 0
    %509 = vmatprep.subr.bf16.mxu0 0
    %510 = vmatpush1.bf16.msra.mxu0 0
    %511 = vmatprep.subr.bf16.mxu0 0
    %512 = vmatpush1.bf16.msra.mxu0 0
    %513 = vmatprep.subr.bf16.mxu0 0
    %514 = vmatpush1.bf16.msra.mxu0 0
    %515 = vmatprep.subr.bf16.mxu0 0
    %516 = vmatpush1.bf16.msra.mxu0 0
    %517 = vmatprep.subr.bf16.mxu0 0
    %518 = vmatpush1.bf16.msra.mxu0 0
    %519 = vmatprep.subr.bf16.mxu0 0
    %520 = vmatpush1.bf16.msra.mxu0 %v503
    %521 = vmatprep.subr.bf16.mxu0 0
    %522 = vmatpush2.bf16.msra.mxu0 0
    %523 = vmatprep.subr.bf16.mxu0 0
    %524 = vmatpush2.bf16.msra.mxu0 0
    %525 = vmatprep.subr.bf16.mxu0 0
    %526 = vmatpush2.bf16.msra.mxu0 0
    %527 = vmatprep.subr.bf16.mxu0 0
    %528 = vmatpush2.bf16.msra.mxu0 0
    %529 = vmatprep.subr.bf16.mxu0 0
    %530 = vmatpush2.bf16.msra.mxu0 0
    %531 = vmatprep.subr.bf16.mxu0 0
    %532 = vmatpush2.bf16.msra.mxu0 0
    %533 = vmatprep.subr.bf16.mxu0 0
    %534 = vmatpush2.bf16.msra.mxu0 0
    %535 = vmatprep.subr.bf16.mxu0 0
    %536 = vmatpush2.bf16.msra.mxu0 0
    %537 = vmatprep.mubr.bf16.mxu0 0
    %538 = vmatmul.mubr.bf16.gmra.mxu0 %v499
    %v539 = vpop.f32.mrf.mxu0
    %v540 = vadd.f32 %v488, %v539
    %v541 = vpop.f32.mrf.mxu0
    %v542 = vpop.f32.mrf.mxu0
    %v543 = vpop.f32.mrf.mxu0
    %544 = vdwg.mxu0
    %v545 = vmax.f32 %v540, 0.0
    %vm546 = vcmask 254976
    %547 = vst.msk [vmem:[#allocation2] sm:$0x3] %vm546, %v545
    %v548 = vsel %vm494, %v479, %v469
    %vm549 = vcmask 58368
    %550 = vst.msk [vmem:[#allocation4] sm:$0x3] %vm549, %v548
    // Predicated region
    $region22: #{encoder_forward.1} parent=1 // pred_check
      _
    $region23: #{encoder_forward.1} parent=1 // pred_check_branch
      %552 = sbr.rel (0) target = $region25
    $region24: #{encoder_forward.1} parent=1 // pred_region
      %s554 = ssub.s32 32, 32
      %555 = vsyncadd [#allocation3], %s554
      %s557 = sshll.u32 [#allocation2], 4
      %s558 = int_to_ptr.vmem [resolvable:$true] %s557
      %560 = dma.vmem_to_hbm [thread:$0]  %s558, 32, %s5, [#allocation3]
    $region25: #{encoder_forward.1} parent=1 // pred_fallthru
      _
    // Predicated region
    $region26: #{encoder_forward.1} parent=1 // pred_check
      _
    $region27: #{encoder_forward.1} parent=1 // pred_check_branch
      %562 = sbr.rel (0) target = $region29
    $region28: #{encoder_forward.1} parent=1 // pred_region
      %s564 = ssub.s32 32, 32
      %565 = vsyncadd [#allocation5], %s564
      %s567 = sshll.u32 [#allocation4], 4
      %s568 = int_to_ptr.vmem [resolvable:$true] %s567
      %570 = dma.vmem_to_hbm [thread:$0]  %s568, 32, %s6, [#allocation5]
    $region29: #{encoder_forward.1} parent=1 // pred_fallthru
      _
    // Predicated region
    $region30: #{encoder_forward.1} parent=1 // pred_check
      _
    $region31: #{encoder_forward.1} parent=1 // pred_check_branch
      %572 = sbr.rel (0) target = $region33
    $region32: #{encoder_forward.1} parent=1 // pred_region
      %573 = dma.done [#allocation3], 32
    $region33: #{encoder_forward.1} parent=1 // pred_fallthru
      _
    // Predicated region
    $region34: #{encoder_forward.1} parent=1 // pred_check
      _
    $region35: #{encoder_forward.1} parent=1 // pred_check_branch
      %575 = sbr.rel (0) target = $region37
    $region36: #{encoder_forward.1} parent=1 // pred_region
      %576 = dma.done [#allocation5], 32
    $region37: #{encoder_forward.1} parent=1 // pred_fallthru
      _
    %577 = vsyncpa [#allocation3], 1
    %578 = vsyncpa [#allocation5], 1

</llo_original>
